<compile_context>
chip_gen: v7x
topology: tpu7x:2x2x1
jax: 0.10.0
libtpu: 0.0.40
codegen_flags: <defaults>
</compile_context>

<pallas_src>
import jax
import jax.numpy as jnp
from jax.experimental import pallas as pl
from jax.experimental.pallas import tpu as pltpu

LAYER_NORM_EPS = 1e-5


def _phi_layernorm_kernel(x_ref, w_ref, b_ref, o_ref):
    # x_ref: (row_tile, D); w_ref/b_ref: (1, D); o_ref: (row_tile, D)
    x = x_ref[...]                       # keep original dtype (no up-front f32 copy)
    inv_d = jnp.float32(1.0 / x.shape[-1])

    # Two independent reductions, f32-accumulated.
    s1 = jnp.sum(x, axis=-1, keepdims=True, dtype=jnp.float32)
    s2 = jnp.sum(jnp.square(x.astype(jnp.float32)), axis=-1, keepdims=True)

    mean = s1 * inv_d
    var = jnp.maximum(s2 * inv_d - mean * mean, 0.0)   # clamp vs. cancellation
    inv = jax.lax.rsqrt(var + LAYER_NORM_EPS)

    w = w_ref[...].astype(jnp.float32)
    b = b_ref[...].astype(jnp.float32)
    o_ref[...] = ((x.astype(jnp.float32) - mean) * inv * w + b).astype(o_ref.dtype)


def _round_up(v: int, m: int) -> int:
    return ((v + m - 1) // m) * m


def _vmem_params():
    """Generation-aware (budget_bytes, vmem_limit_bytes)."""
    cap = 128 * 1024 * 1024  # v5e/v6e default
    try:
        info = pltpu.get_tpu_info()
        cap = int(getattr(info, "vmem_capacity_bytes", cap)) or cap
    except Exception:
        pass
    budget = int(cap * 0.40)                              # ~25 MiB v7x, ~51 MiB v5e/v6e
    limit = min(int(cap * 0.75), 96 * 1024 * 1024)        # 48 MiB v7x, 96 MiB v5e/v6e
    return budget, limit


def _pick_row_tile(rows: int, d: int, itemsize: int, vmem_budget_bytes: int) -> int:
    rows8 = _round_up(rows, 8)
    # Per-row VMEM cost:
    #   input tile double-buffered  (2 * itemsize)
    #   output tile double-buffered (2 * itemsize)
    #   ~4 full-tile f32 temporaries inside the body (16 bytes)
    per_row = d * (4 * itemsize + 16)
    tile = vmem_budget_bytes // max(per_row, 1)
    tile = max(8, min(512, (tile // 8) * 8, rows8))       # multiple of 8 sublanes, capped

    # Enough grid steps to hide DMA (double-buffer) and feed both v7x TCs (>=2 each).
    nblk = pl.cdiv(rows, tile)
    if rows8 // 8 >= 4:
        nblk = max(nblk, 4)
    if nblk > 1 and nblk % 2:                              # even block count (best effort)
        nblk += 1
    tile = max(8, min(tile, _round_up(pl.cdiv(rows, nblk), 8)))
    return int(tile)


def phi_layernorm(x: jax.Array, weight: jax.Array, bias: jax.Array,
                  *, row_tile: int | None = None,
                  vmem_limit_bytes: int | None = None) -> jax.Array:
    """LayerNorm over the last axis of x (any leading shape), matching torch.nn.LayerNorm."""
    orig_shape = x.shape
    d = orig_shape[-1]
    rows = 1
    for s in orig_shape[:-1]:
        rows *= s

    x2 = x.reshape(rows, d)
    w2 = weight.reshape(1, d)
    b2 = bias.reshape(1, d)

    budget, limit = _vmem_params()
    if vmem_limit_bytes is None:
        vmem_limit_bytes = limit
    if row_tile is None:
        row_tile = _pick_row_tile(rows, d, x2.dtype.itemsize, budget)

    grid = (pl.cdiv(rows, row_tile),)

    out = pl.pallas_call(
        _phi_layernorm_kernel,
        out_shape=jax.ShapeDtypeStruct((rows, d), x.dtype),
        grid_spec=pltpu.PrefetchScalarGridSpec(
            num_scalar_prefetch=0,
            grid=grid,
            in_specs=[
                pl.BlockSpec((row_tile, d), lambda i: (i, 0)),
                pl.BlockSpec((1, d), lambda i: (0, 0)),   # weight: VMEM-resident
                pl.BlockSpec((1, d), lambda i: (0, 0)),   # bias:   VMEM-resident
            ],
            out_specs=pl.BlockSpec((row_tile, d), lambda i: (i, 0)),
        ),
        compiler_params=pltpu.CompilerParams(
            dimension_semantics=("parallel",),
            vmem_limit_bytes=int(vmem_limit_bytes),
        ),
    )(x2, w2, b2)

    return out.reshape(orig_shape)


def phi_sequential_wrapper_layernorm(inputs: tuple, weight: jax.Array, bias: jax.Array) -> tuple:
    """Mirrors PhiSequentialWrapper.forward for a wrapped PhiLayerNorm:
    normalize input[0], pass the rest of the tuple through unchanged."""
    # TODO(synk): PhiEmbedding / PhiDecoderLayer branches wrap arbitrary submodules
    # (embedding lookup, full decoder block, gradient checkpointing) and are not
    # translated here; only the PhiLayerNorm branch has a clean Pallas equivalent.
    out = phi_layernorm(inputs[0], weight, bias)
    return (out,) + tuple(inputs[1:])


def _ref_layernorm(x, weight, bias):
    x = x.astype(jnp.float32)
    mean = jnp.mean(x, axis=-1, keepdims=True)
    var = jnp.mean((x - mean) ** 2, axis=-1, keepdims=True)
    return (x - mean) / jnp.sqrt(var + LAYER_NORM_EPS) * weight + bias


if __name__ == "__main__":
    # Small shapes consistent with the module: (batch, seq, hidden)
    batch, seq, hidden = 2, 8, 32
    key = jax.random.PRNGKey(0)
    kx, kw, kb, kx2, kx3 = jax.random.split(key, 5)

    x = jax.random.normal(kx, (batch, seq, hidden), dtype=jnp.float32)
    weight = jnp.ones((hidden,), jnp.float32) + 0.1 * jax.random.normal(kw, (hidden,), jnp.float32)
    bias = 0.1 * jax.random.normal(kb, (hidden,), jnp.float32)

    # Test 1: wrapper-style call, auto-tiled (generation-aware budget/limit).
    outputs = phi_sequential_wrapper_layernorm((x, None), weight, bias)
    out = jax.block_until_ready(outputs[0])
    ref = _ref_layernorm(x, weight, bias)
    assert jnp.max(jnp.abs(out - ref)) < 1e-4, "mismatch vs reference LayerNorm (test 1)"
    assert outputs[1] is None, "tuple passthrough broken"

    # Test 2: ragged multi-block path (rows not a multiple of row_tile) to exercise
    # the masked boundary writes of the last grid step.
    x_r = jax.random.normal(kx2, (3, 25, hidden), dtype=jnp.float32)  # rows = 75
    out_r = jax.block_until_ready(phi_layernorm(x_r, weight, bias, row_tile=32))
    ref_r = _ref_layernorm(x_r, weight, bias)
    assert jnp.max(jnp.abs(out_r - ref_r)) < 1e-4, "mismatch vs reference LayerNorm (test 2, ragged)"

    # Test 3: bf16 path (f32-accumulated reductions, no up-front f32 tile copy).
    x_bf = jax.random.normal(kx3, (batch, seq, hidden), dtype=jnp.float32).astype(jnp.bfloat16)
    out_bf = jax.block_until_ready(phi_layernorm(x_bf, weight, bias))
    ref_bf = _ref_layernorm(x_bf.astype(jnp.float32), weight, bias)
    assert jnp.max(jnp.abs(out_bf.astype(jnp.float32) - ref_bf)) < 5e-2, \
        "mismatch vs reference LayerNorm (test 3, bf16)"

    print("KERNEL_OK")
</pallas_src>

<mosaic_0001>
module attributes {stable_mosaic.version = 11 : i64} {
  func.func @_phi_layernorm_kernel(%arg0: i32, %arg1: memref<16x32xf32, #tpu.memory_space<vmem>>, %arg2: memref<1x32xf32, #tpu.memory_space<vmem>>, %arg3: memref<1x32xf32, #tpu.memory_space<vmem>>, %arg4: memref<16x32xf32, #tpu.memory_space<vmem>>) attributes {dimension_semantics = [#tpu.dimension_semantics<parallel>], iteration_bounds = array<i64: 1>, scalar_prefetch = 0 : i64, scratch_operands = 0 : i64, tpu.core_type = #tpu.core_type<tc>, window_params = [{transform_indices = @transform_0, window_bounds = array<i64: 16, 32>}, {pipeline_mode = #tpu.pipeline_mode<synchronous>, transform_indices = @transform_1, window_bounds = array<i64: 1, 32>}, {pipeline_mode = #tpu.pipeline_mode<synchronous>, transform_indices = @transform_2, window_bounds = array<i64: 1, 32>}, {transform_indices = @transform_3, window_bounds = array<i64: 16, 32>}]} {
    %c0 = arith.constant 0 : index
    %c0_0 = arith.constant 0 : index
    %0 = vector.load %arg1[%c0, %c0_0] : memref<16x32xf32, #tpu.memory_space<vmem>>, vector<16x32xf32>
    %cst = arith.constant dense<0.000000e+00> : vector<16xf32>
    %1 = vector.multi_reduction <add>, %0, %cst [1] : vector<16x32xf32> to vector<16xf32>
    %2 = vector.shape_cast %1 : vector<16xf32> to vector<16x1xf32>
    %3 = arith.mulf %0, %0 : vector<16x32xf32>
    %cst_1 = arith.constant dense<0.000000e+00> : vector<16xf32>
    %4 = vector.multi_reduction <add>, %3, %cst_1 [1] : vector<16x32xf32> to vector<16xf32>
    %5 = vector.shape_cast %4 : vector<16xf32> to vector<16x1xf32>
    %cst_2 = arith.constant 3.125000e-02 : f32
    %6 = vector.broadcast %cst_2 : f32 to vector<16x1xf32>
    %7 = arith.mulf %2, %6 : vector<16x1xf32>
    %cst_3 = arith.constant 3.125000e-02 : f32
    %8 = vector.broadcast %cst_3 : f32 to vector<16x1xf32>
    %9 = arith.mulf %5, %8 : vector<16x1xf32>
    %10 = arith.mulf %7, %7 : vector<16x1xf32>
    %11 = arith.subf %9, %10 : vector<16x1xf32>
    %cst_4 = arith.constant 0.000000e+00 : f32
    %12 = vector.broadcast %cst_4 : f32 to vector<16x1xf32>
    %13 = arith.maximumf %11, %12 : vector<16x1xf32>
    %cst_5 = arith.constant 9.99999974E-6 : f32
    %14 = vector.broadcast %cst_5 : f32 to vector<16x1xf32>
    %15 = arith.addf %13, %14 : vector<16x1xf32>
    %16 = math.rsqrt %15 : vector<16x1xf32>
    %c0_6 = arith.constant 0 : index
    %c0_7 = arith.constant 0 : index
    %17 = vector.load %arg2[%c0_6, %c0_7] : memref<1x32xf32, #tpu.memory_space<vmem>>, vector<1x32xf32>
    %c0_8 = arith.constant 0 : index
    %c0_9 = arith.constant 0 : index
    %18 = vector.load %arg3[%c0_8, %c0_9] : memref<1x32xf32, #tpu.memory_space<vmem>>, vector<1x32xf32>
    %19 = vector.broadcast %7 : vector<16x1xf32> to vector<16x32xf32>
    %20 = arith.subf %0, %19 : vector<16x32xf32>
    %21 = vector.broadcast %16 : vector<16x1xf32> to vector<16x32xf32>
    %22 = arith.mulf %20, %21 : vector<16x32xf32>
    %23 = vector.broadcast %17 : vector<1x32xf32> to vector<16x32xf32>
    %24 = arith.mulf %22, %23 : vector<16x32xf32>
    %25 = vector.broadcast %18 : vector<1x32xf32> to vector<16x32xf32>
    %26 = arith.addf %24, %25 : vector<16x32xf32>
    %c0_10 = arith.constant 0 : index
    %c0_11 = arith.constant 0 : index
    %27 = vector.load %arg4[%c0_10, %c0_11] : memref<16x32xf32, #tpu.memory_space<vmem>>, vector<16x32xf32>
    tpu.vector_store %arg4[%c0_10, %c0_11], %26 {strides = array<i32>} : memref<16x32xf32, #tpu.memory_space<vmem>>, vector<16x32xf32>,
    return
  }
  func.func @transform_0(%arg0: i32) -> (i32, i32) {
    %c0_i32 = arith.constant 0 : i32
    %c0_i32_0 = arith.constant 0 : i32
    return %arg0, %c0_i32 : i32, i32
  }
  func.func @transform_1(%arg0: i32) -> (i32, i32) {
    %c0_i32 = arith.constant 0 : i32
    %c0_i32_0 = arith.constant 0 : i32
    %c0_i32_1 = arith.constant 0 : i32
    return %c0_i32, %c0_i32_0 : i32, i32
  }
  func.func @transform_2(%arg0: i32) -> (i32, i32) {
    %c0_i32 = arith.constant 0 : i32
    %c0_i32_0 = arith.constant 0 : i32
    %c0_i32_1 = arith.constant 0 : i32
    return %c0_i32, %c0_i32_0 : i32, i32
  }
  func.func @transform_3(%arg0: i32) -> (i32, i32) {
    %c0_i32 = arith.constant 0 : i32
    %c0_i32_0 = arith.constant 0 : i32
    return %arg0, %c0_i32 : i32, i32
  }
}

</mosaic_0001>

<llo_original>
// kernel: tpu_custom_call.1
$region0: #{tpu_custom_call.1}
  #allocation0 [shape = 'u32[]', space=smem, size = 0x4, offset = 0x4, fixed_abs, tag = 'smem constant byte address 0x4 - core index']
  #allocation1 [shape = 'u32[144,128]{1,0:T(1,128)}', space=vmem, size = 0x12000, scoped, tag = 'internal scratch']
  %s0 = inlined_call_operand.hbm [shape: f32[16,32], index: 0, kind: input, shape index: {}]
  %s1 = inlined_call_operand.hbm [shape: f32[1,32], index: 1, kind: input, shape index: {}]
  %s2 = inlined_call_operand.hbm [shape: f32[1,32], index: 2, kind: input, shape index: {}]
  %s3 = inlined_call_operand.hbm [shape: f32[16,32], index: 3, kind: output, shape index: {}]
  %s4 = sld [smem:[#allocation0]]
  $region34: #{tpu_custom_call.1} parent=0
    _
  %s6 = ssub.s32 1, %s4
  %s7 = scalar_select 0, %s6, %s4
  $region1: #{tpu_custom_call.1} parent=0
    #allocation2 [shape = 'u8[8192]{0}', space=vmem, size = 0x2000, scoped, tag = 'input window, operand 0, single buffered']
    #allocation3 [shape = 's32[1]{0}', space=sflag, size = 0x4, scoped, tag = 'scoped memory for tpu_custom_call.1']
    #allocation4 [shape = 's32[1]{0}', space=sflag, size = 0x4, scoped, tag = 'scoped memory for tpu_custom_call.1']
    #allocation5 [shape = 'u8[512]{0}', space=vmem, size = 0x400, scoped, tag = 'input window, operand 1, single buffered']
    #allocation6 [shape = 's32[1]{0}', space=sflag, size = 0x4, scoped, tag = 'scoped memory for tpu_custom_call.1']
    #allocation7 [shape = 'u8[512]{0}', space=vmem, size = 0x400, scoped, tag = 'input window, operand 2, single buffered']
    #allocation8 [shape = 'u8[8192]{0}', space=vmem, size = 0x2000, scoped, tag = 'output window, operand 0, single buffered']
    %8 = vsyncpa [#allocation3], 0
    %9 = vsyncpa [#allocation6], 0
    %10 = vsyncpa [#allocation4], 0
    // Predicated region
    $region2: #{tpu_custom_call.1} parent=1 // pred_check
      _
    $region3: #{tpu_custom_call.1} parent=1 // pred_check_branch
      %12 = sbr.rel (0) target = $region5
    $region4: #{tpu_custom_call.1} parent=1 // pred_region
      %s14 = ssub.s32 256, 256
      %15 = vsyncadd [#allocation3], %s14
      %s16 = sshll.u32 [#allocation2], 4
      %s17 = int_to_ptr.vmem [resolvable:$true] %s16
      %22 = dma.hbm_to_vmem [thread:$0]  %s0, 256, %s17, [#allocation3], 128, 128, 8
    $region5: #{tpu_custom_call.1} parent=1 // pred_fallthru
      _
    // Predicated region
    $region6: #{tpu_custom_call.1} parent=1 // pred_check
      _
    $region7: #{tpu_custom_call.1} parent=1 // pred_check_branch
      %24 = sbr.rel (0) target = $region9
    $region8: #{tpu_custom_call.1} parent=1 // pred_region
      %s26 = ssub.s32 16, 16
      %27 = vsyncadd [#allocation6], %s26
      %s29 = sshll.u32 [#allocation5], 4
      %s30 = int_to_ptr.vmem [resolvable:$true] %s29
      %32 = dma.hbm_to_vmem [thread:$0]  %s1, 16, %s30, [#allocation6]
    $region9: #{tpu_custom_call.1} parent=1 // pred_fallthru
      _
    // Predicated region
    $region10: #{tpu_custom_call.1} parent=1 // pred_check
      _
    $region11: #{tpu_custom_call.1} parent=1 // pred_check_branch
      %34 = sbr.rel (0) target = $region13
    $region12: #{tpu_custom_call.1} parent=1 // pred_region
      %s36 = ssub.s32 16, 16
      %37 = vsyncadd [#allocation6], %s36
      %s39 = sshll.u32 [#allocation7], 4
      %s40 = int_to_ptr.vmem [resolvable:$true] %s39
      %42 = dma.hbm_to_vmem [thread:$0]  %s2, 16, %s40, [#allocation6]
    $region13: #{tpu_custom_call.1} parent=1 // pred_fallthru
      _
    // Predicated region
    $region14: #{tpu_custom_call.1} parent=1 // pred_check
      _
    $region15: #{tpu_custom_call.1} parent=1 // pred_check_branch
      %44 = sbr.rel (0) target = $region17
    $region16: #{tpu_custom_call.1} parent=1 // pred_region
      %45 = dma.done [#allocation3], 256
    $region17: #{tpu_custom_call.1} parent=1 // pred_fallthru
      _
    // Predicated region
    $region18: #{tpu_custom_call.1} parent=1 // pred_check
      _
    $region19: #{tpu_custom_call.1} parent=1 // pred_check_branch
      %47 = sbr.rel (0) target = $region21
    $region20: #{tpu_custom_call.1} parent=1 // pred_region
      %48 = dma.done [#allocation6], 16
    $region21: #{tpu_custom_call.1} parent=1 // pred_fallthru
      _
    // Predicated region
    $region22: #{tpu_custom_call.1} parent=1 // pred_check
      _
    $region23: #{tpu_custom_call.1} parent=1 // pred_check_branch
      %50 = sbr.rel (0) target = $region25
    $region24: #{tpu_custom_call.1} parent=1 // pred_region
      %51 = dma.done [#allocation6], 16
    $region25: #{tpu_custom_call.1} parent=1 // pred_fallthru
      _
    %v52 = vld [vmem:[#allocation2] sm:$0xff]
    %v53 = vld [vmem:[#allocation2 + $0x8] sm:$0xff]
    %vm54 = vcmask 261120
    %v55 = vsel %vm54, %v52, 0.0
    %56 = vadd.xlane.f32.xlu0 %v55
    %v57 = vpop.xlane.xlu0 %56
    %v58 = vsel %vm54, %v53, 0.0
    %59 = vadd.xlane.f32.xlu0 %v58
    %v60 = vpop.xlane.xlu0 %59
    %v61 = vmul.f32 %v52, %v52
    %v62 = vmul.f32 %v53, %v53
    %v63 = vsel %vm54, %v61, 0.0
    %64 = vadd.xlane.f32.xlu0 %v63
    %v65 = vpop.xlane.xlu0 %64
    %v66 = vsel %vm54, %v62, 0.0
    %67 = vadd.xlane.f32.xlu0 %v66
    %v68 = vpop.xlane.xlu0 %67
    %v69 = vmul.f32 %v57, 0.03125
    %v70 = vmul.f32 %v60, 0.03125
    %v71 = vmul.f32 %v65, 0.03125
    %v72 = vmul.f32 %v68, 0.03125
    %v73 = vmul.f32 %v69, %v69
    %v74 = vmul.f32 %v70, %v70
    %v75 = vsub.f32 %v71, %v73
    %v76 = vsub.f32 %v72, %v74
    %v77 = vmax.f32 %v75, 0.0
    %v78 = vmax.f32 %v76, 0.0
    %v79 = vadd.f32 %v77, 1e-05
    %v80 = vadd.f32 %v78, 1e-05
    %v81 = vrsqrt.pop %v79
    %v82 = vrsqrt.pop %v80
    %v83 = vld [vmem:[#allocation5] sm:$0x1]
    %v84 = vld [vmem:[#allocation7] sm:$0x1]
    %v85 = vsub.f32 %v52, %v69
    %v86 = vsub.f32 %v53, %v70
    %v87 = vmul.f32 %v85, %v81
    %v88 = vmul.f32 %v86, %v82
    %v90 = vlaneseq
    %v91 = vshrl.u32 %v90, 7
    %v92 = vsub.s32 0, %v91
    %v93 = vrot.slane %v83, %v92
    %v95 = vmul.f32 %v87, %v93
    %v96 = vmul.f32 %v88, %v93
    %v98 = vlaneseq
    %v99 = vshrl.u32 %v98, 7
    %v100 = vsub.s32 0, %v99
    %v101 = vrot.slane %v84, %v100
    %v103 = vadd.f32 %v95, %v101
    %v104 = vadd.f32 %v96, %v101
    %105 = vst.msk [vmem:[#allocation8] sm:$0xff] %vm54, %v103
    %106 = vst.msk [vmem:[#allocation8 + $0x8] sm:$0xff] %vm54, %v104
    // Predicated region
    $region26: #{tpu_custom_call.1} parent=1 // pred_check
      _
    $region27: #{tpu_custom_call.1} parent=1 // pred_check_branch
      %108 = sbr.rel (0) target = $region29
    $region28: #{tpu_custom_call.1} parent=1 // pred_region
      %s110 = ssub.s32 256, 256
      %111 = vsyncadd [#allocation4], %s110
      %s112 = sshll.u32 [#allocation8], 4
      %s113 = int_to_ptr.vmem [resolvable:$true] %s112
      %118 = dma.vmem_to_hbm [thread:$0]  %s113, 256, %s3, [#allocation4], 128, 128, 8
    $region29: #{tpu_custom_call.1} parent=1 // pred_fallthru
      _
    // Predicated region
    $region30: #{tpu_custom_call.1} parent=1 // pred_check
      _
    $region31: #{tpu_custom_call.1} parent=1 // pred_check_branch
      %120 = sbr.rel (0) target = $region33
    $region32: #{tpu_custom_call.1} parent=1 // pred_region
      %121 = dma.done [#allocation4], 256
    $region33: #{tpu_custom_call.1} parent=1 // pred_fallthru
      _
    %122 = vsyncpa [#allocation3], 1
    %123 = vsyncpa [#allocation6], 1
    %124 = vsyncpa [#allocation4], 1

</llo_original>
